<compile_context>
chip_gen: v7x
topology: tpu7x:2x2x1
jax: 0.10.0
libtpu: 0.0.40
codegen_flags: <defaults>
</compile_context>

<pallas_src>
import jax
import jax.numpy as jnp
from jax.experimental import pallas as pl
from jax.experimental.pallas import tpu as pltpu
import numpy as np


def _round_up(x, m):
    return ((x + m - 1) // m) * m


def _vmem_capacity_bytes():
    try:
        return int(pltpu.get_tpu_info().vmem_capacity_bytes)
    except Exception:
        return 64 * 1024 * 1024  # conservative fallback (v7x per-TC VMEM)


def utility_kernel(ctx_ref, w_ref, out_ref):
    # ctx_ref: (tb, A*d)  flattened, lane-dense context tile
    # w_ref:   (A*d, A)   block-diagonal theta weight
    # out_ref: (tb, A)    softmax probabilities over the action axis
    u = jnp.dot(ctx_ref[...], w_ref[...],
                preferred_element_type=jnp.float32)          # (tb, A) on MXU

    # Numerically stable, strictly row-wise softmax.  Partial last-block rows
    # may contain garbage, but they are masked on the write and can never leak
    # into valid rows because every reduction is per-row.
    m = jnp.max(u, axis=-1, keepdims=True)
    e = jnp.exp(u - m)
    s = jnp.sum(e, axis=-1, keepdims=True)
    out_ref[...] = (e / s).astype(out_ref.dtype)


def utility_forward(context, theta, *, tb=None):
    """Pallas implementation of Utility.forward.

    context: (A, d) or (B, A, d) float32
    theta:   (d,)              float32
    returns: (A,)  or (B, A)   float32 — softmax over the A axis.
    """
    squeeze_batch = context.ndim == 2
    if squeeze_batch:
        context = context[None]                              # (1, A, d)
    B, A, d = context.shape
    itemsize = context.dtype.itemsize

    # Flatten (A, d) onto a single lane axis -> fully dense DMA tiles.
    ctx2d = context.reshape(B, A * d)

    # Block-diagonal weight: W[a*d + i, a'] = theta[i] * (a == a'), so
    # ctx2d @ W == einsum('bad,d->ba', context, theta).
    eye = jnp.eye(A, dtype=theta.dtype)                      # (A, A)
    w = (eye[:, None, :] * theta.reshape(1, d, 1)).reshape(A * d, A)

    if tb is None:
        # Budget the PADDED ctx tile at ~4 MiB per buffer (double-buffered by
        # the pipeline).  Padded VMEM bytes per batch row = round_up(A*d, 128)
        # * itemsize, NOT the logical A*d*itemsize.
        padded_row = _round_up(A * d, 128) * itemsize
        tb = max(1, min(B, (4 * 1024 * 1024) // max(padded_row, 1)))
        # v7x megacore: keep at least 2 grid steps when B is big enough so
        # both TensorCores get work (no-op on single-TC v5e/v6e).
        if B >= 16:
            tb = min(tb, max(8, ((B // 2) // 8) * 8))
    if tb < B:
        # Partial-extent blocks need the second-to-last dim to be a multiple
        # of 8 (sublanes).
        tb = max(8, (tb // 8) * 8)
    else:
        tb = B
    grid_b = pl.cdiv(B, tb)

    # Scoped-VMEM limit from the padded, double-buffered footprint (+ slack),
    # clamped to 3/4 of this generation's physical VMEM.
    ctx_tile = _round_up(tb, 8) * _round_up(A * d, 128) * itemsize
    w_tile = _round_up(A * d, 8) * _round_up(A, 128) * itemsize
    out_tile = _round_up(tb, 8) * _round_up(A, 128) * itemsize
    needed = 2 * (ctx_tile + w_tile + out_tile) + (2 << 20)
    vmem_limit = int(min(max(needed, 32 * 1024 * 1024),
                         _vmem_capacity_bytes() * 3 // 4))

    cost = pl.CostEstimate(
        flops=2 * B * A * d + 4 * B * A,
        transcendentals=B * A,
        bytes_accessed=(ctx2d.size + w.size + B * A) * itemsize,
    )

    out = pl.pallas_call(
        utility_kernel,
        out_shape=jax.ShapeDtypeStruct((B, A), context.dtype),
        grid_spec=pltpu.PrefetchScalarGridSpec(
            num_scalar_prefetch=0,
            grid=(grid_b,),
            in_specs=[
                pl.BlockSpec((tb, A * d), lambda b: (b, 0)),
                pl.BlockSpec((A * d, A), lambda b: (0, 0)),
            ],
            out_specs=pl.BlockSpec((tb, A), lambda b: (b, 0)),
        ),
        compiler_params=pltpu.CompilerParams(
            dimension_semantics=("parallel",),
            vmem_limit_bytes=vmem_limit,
        ),
        cost_estimate=cost,
    )(ctx2d, w)

    if squeeze_batch:
        out = out[0]                                          # (A,)
    return out


if __name__ == "__main__":
    key = jax.random.PRNGKey(0)
    k_ctx, k_theta = jax.random.split(key)

    B, A, d = 2, 8, 32                                        # small shapes consistent with the module
    context = jax.random.normal(k_ctx, (B, A, d), dtype=jnp.float32)
    # nn.Parameter(torch.rand(d)) -> uniform [0, 1) init
    theta = jax.random.uniform(k_theta, (d,), dtype=jnp.float32)

    prob = utility_forward(context, theta)
    jax.block_until_ready(prob)

    # Pure-JAX reference (softmax over dim 1 for 3-D input).
    ref = jax.nn.softmax(jnp.einsum("bad,d->ba", context, theta), axis=1)
    np.testing.assert_allclose(np.asarray(prob), np.asarray(ref), rtol=1e-4, atol=1e-5)

    # 2-D path (softmax over dim 0), matching PyTorch semantics.
    prob2d = utility_forward(context[0], theta)
    jax.block_until_ready(prob2d)
    ref2d = jax.nn.softmax(context[0] @ theta, axis=0)
    np.testing.assert_allclose(np.asarray(prob2d), np.asarray(ref2d), rtol=1e-4, atol=1e-5)

    print("KERNEL_OK")
</pallas_src>

<mosaic_0001>
module attributes {stable_mosaic.version = 11 : i64} {
  func.func @utility_kernel(%arg0: i32, %arg1: memref<2x256xf32, #tpu.memory_space<vmem>>, %arg2: memref<256x8xf32, #tpu.memory_space<vmem>>, %arg3: memref<2x8xf32, #tpu.memory_space<vmem>>) attributes {dimension_semantics = [#tpu.dimension_semantics<parallel>], iteration_bounds = array<i64: 1>, scalar_prefetch = 0 : i64, scratch_operands = 0 : i64, tpu.core_type = #tpu.core_type<tc>, window_params = [{transform_indices = @transform_0, window_bounds = array<i64: 2, 256>}, {pipeline_mode = #tpu.pipeline_mode<synchronous>, transform_indices = @transform_1, window_bounds = array<i64: 256, 8>}, {transform_indices = @transform_2, window_bounds = array<i64: 2, 8>}]} {
    %c0 = arith.constant 0 : index
    %c0_0 = arith.constant 0 : index
    %0 = vector.load %arg1[%c0, %c0_0] : memref<2x256xf32, #tpu.memory_space<vmem>>, vector<2x256xf32>
    %c0_1 = arith.constant 0 : index
    %c0_2 = arith.constant 0 : index
    %1 = vector.load %arg2[%c0_1, %c0_2] : memref<256x8xf32, #tpu.memory_space<vmem>>, vector<256x8xf32>
    %cst = arith.constant dense<0.000000e+00> : vector<2x8xf32>
    %2 = tpu.matmul %0, %1, %cst {dimension_numbers = #tpu.dot_dimension_numbers<[1], [0], [0], [1], [0, 0, 1, 1], [], []>} : vector<2x256xf32>, vector<256x8xf32>, vector<2x8xf32> -> vector<2x8xf32>
    %cst_3 = arith.constant dense<0xFF800000> : vector<2xf32>
    %3 = vector.multi_reduction <maximumf>, %2, %cst_3 [1] : vector<2x8xf32> to vector<2xf32>
    %4 = vector.shape_cast %3 : vector<2xf32> to vector<2x1xf32>
    %5 = vector.broadcast %4 : vector<2x1xf32> to vector<2x8xf32>
    %6 = arith.subf %2, %5 : vector<2x8xf32>
    %7 = math.exp %6 : vector<2x8xf32>
    %cst_4 = arith.constant dense<0.000000e+00> : vector<2xf32>
    %8 = vector.multi_reduction <add>, %7, %cst_4 [1] : vector<2x8xf32> to vector<2xf32>
    %9 = vector.shape_cast %8 : vector<2xf32> to vector<2x1xf32>
    %10 = vector.broadcast %9 : vector<2x1xf32> to vector<2x8xf32>
    %11 = arith.divf %7, %10 : vector<2x8xf32>
    %c0_5 = arith.constant 0 : index
    %c0_6 = arith.constant 0 : index
    %12 = vector.load %arg3[%c0_5, %c0_6] : memref<2x8xf32, #tpu.memory_space<vmem>>, vector<2x8xf32>
    tpu.vector_store %arg3[%c0_5, %c0_6], %11 {strides = array<i32>} : memref<2x8xf32, #tpu.memory_space<vmem>>, vector<2x8xf32>,
    return
  }
  func.func @transform_0(%arg0: i32) -> (i32, i32) {
    %c0_i32 = arith.constant 0 : i32
    %c0_i32_0 = arith.constant 0 : i32
    return %arg0, %c0_i32 : i32, i32
  }
  func.func @transform_1(%arg0: i32) -> (i32, i32) {
    %c0_i32 = arith.constant 0 : i32
    %c0_i32_0 = arith.constant 0 : i32
    %c0_i32_1 = arith.constant 0 : i32
    return %c0_i32, %c0_i32_0 : i32, i32
  }
  func.func @transform_2(%arg0: i32) -> (i32, i32) {
    %c0_i32 = arith.constant 0 : i32
    %c0_i32_0 = arith.constant 0 : i32
    return %arg0, %c0_i32 : i32, i32
  }
}

</mosaic_0001>

<llo_original>
// kernel: tpu_custom_call.1
$region0: #{tpu_custom_call.1}
  #allocation0 [shape = 'u32[]', space=smem, size = 0x4, offset = 0x4, fixed_abs, tag = 'smem constant byte address 0x4 - core index']
  #allocation1 [shape = 'u32[144,128]{1,0:T(1,128)}', space=vmem, size = 0x12000, scoped, tag = 'internal scratch']
  %s0 = inlined_call_operand.vmem [shape: f32[2,256], index: 0, kind: input, shape index: {}]
  %s1 = inlined_call_operand.vmem [shape: f32[256,8], index: 1, kind: input, shape index: {}]
  %s2 = inlined_call_operand.hbm [shape: f32[2,8], index: 2, kind: output, shape index: {}]
  %s3 = sld [smem:[#allocation0]]
  $region18: #{tpu_custom_call.1} parent=0
    _
  %s5 = ssub.s32 1, %s3
  %s6 = scalar_select 0, %s5, %s3
  $region1: #{tpu_custom_call.1} parent=0
    #allocation2 [shape = 'u8[1024]{0}', space=vmem, size = 0x400, scoped, tag = 'output window, operand 0, single buffered']
    #allocation3 [shape = 's32[1]{0}', space=sflag, size = 0x4, scoped, tag = 'scoped memory for tpu_custom_call.1']
    %7 = vsyncpa [#allocation3], 0
    // Predicated region
    $region2: #{tpu_custom_call.1} parent=1 // pred_check
      _
    $region3: #{tpu_custom_call.1} parent=1 // pred_check_branch
      %9 = sbr.rel (0) target = $region5
    $region4: #{tpu_custom_call.1} parent=1 // pred_region
      _
    $region5: #{tpu_custom_call.1} parent=1 // pred_fallthru
      _
    // Predicated region
    $region6: #{tpu_custom_call.1} parent=1 // pred_check
      _
    $region7: #{tpu_custom_call.1} parent=1 // pred_check_branch
      %11 = sbr.rel (0) target = $region9
    $region8: #{tpu_custom_call.1} parent=1 // pred_region
      _
    $region9: #{tpu_custom_call.1} parent=1 // pred_fallthru
      _
    %v12 = vld [vmem:[%s0] sm:$0xf]
    %v13 = vld [vmem:[%s1] sm:$0xff]
    %v14 = vld [vmem:[%s1 + $0x8] sm:$0xff]
    %v15 = vld [vmem:[%s1 + $0x10] sm:$0xff]
    %v16 = vld [vmem:[%s1 + $0x18] sm:$0xff]
    %v17 = vld [vmem:[%s1 + $0x20] sm:$0xff]
    %v18 = vld [vmem:[%s1 + $0x28] sm:$0xff]
    %v19 = vld [vmem:[%s1 + $0x30] sm:$0xff]
    %v20 = vld [vmem:[%s1 + $0x38] sm:$0xff]
    %v21 = vld [vmem:[%s1 + $0x40] sm:$0xff]
    %v22 = vld [vmem:[%s1 + $0x48] sm:$0xff]
    %v23 = vld [vmem:[%s1 + $0x50] sm:$0xff]
    %v24 = vld [vmem:[%s1 + $0x58] sm:$0xff]
    %v25 = vld [vmem:[%s1 + $0x60] sm:$0xff]
    %v26 = vld [vmem:[%s1 + $0x68] sm:$0xff]
    %v27 = vld [vmem:[%s1 + $0x70] sm:$0xff]
    %v28 = vld [vmem:[%s1 + $0x78] sm:$0xff]
    %v29 = vld [vmem:[%s1 + $0x80] sm:$0xff]
    %v30 = vld [vmem:[%s1 + $0x88] sm:$0xff]
    %v31 = vld [vmem:[%s1 + $0x90] sm:$0xff]
    %v32 = vld [vmem:[%s1 + $0x98] sm:$0xff]
    %v33 = vld [vmem:[%s1 + $0xa0] sm:$0xff]
    %v34 = vld [vmem:[%s1 + $0xa8] sm:$0xff]
    %v35 = vld [vmem:[%s1 + $0xb0] sm:$0xff]
    %v36 = vld [vmem:[%s1 + $0xb8] sm:$0xff]
    %v37 = vld [vmem:[%s1 + $0xc0] sm:$0xff]
    %v38 = vld [vmem:[%s1 + $0xc8] sm:$0xff]
    %v39 = vld [vmem:[%s1 + $0xd0] sm:$0xff]
    %v40 = vld [vmem:[%s1 + $0xd8] sm:$0xff]
    %v41 = vld [vmem:[%s1 + $0xe0] sm:$0xff]
    %v42 = vld [vmem:[%s1 + $0xe8] sm:$0xff]
    %v43 = vld [vmem:[%s1 + $0xf0] sm:$0xff]
    %v44 = vld [vmem:[%s1 + $0xf8] sm:$0xff]
    %v47 = vunpack.c.l.s4 1983009808
    %v48 = vunpack.c.0.s8 %v47
    %v49 = vlaneseq
    %v50 = vshrl.u32 %v49, 7
    %v51 = vsub.s32 %v48, %v50
    %v52 = vrot.slane %v12, %v51
    %v53 = vcombine.high %v52, %v52
    %56 = vmatprep.subr.mxu0 0.0
    %57 = vmatpush1.msra.mxu0 %v13
    %58 = vmatprep.subr.mxu0 0.0
    %59 = vmatpush1.msra.mxu0 %v14
    %60 = vmatprep.subr.mxu0 0.0
    %61 = vmatpush1.msra.mxu0 %v15
    %62 = vmatprep.subr.mxu0 0.0
    %63 = vmatpush1.msra.mxu0 %v16
    %64 = vmatprep.subr.mxu0 0.0
    %65 = vmatpush1.msra.mxu0 %v17
    %66 = vmatprep.subr.mxu0 0.0
    %67 = vmatpush1.msra.mxu0 %v18
    %68 = vmatprep.subr.mxu0 0.0
    %69 = vmatpush1.msra.mxu0 %v19
    %70 = vmatprep.subr.mxu0 0.0
    %71 = vmatpush1.msra.mxu0 %v20
    %72 = vmatprep.subr.mxu0 0.0
    %73 = vmatpush1.msra.mxu0 %v21
    %74 = vmatprep.subr.mxu0 0.0
    %75 = vmatpush1.msra.mxu0 %v22
    %76 = vmatprep.subr.mxu0 0.0
    %77 = vmatpush1.msra.mxu0 %v23
    %78 = vmatprep.subr.mxu0 0.0
    %79 = vmatpush1.msra.mxu0 %v24
    %80 = vmatprep.subr.mxu0 0.0
    %81 = vmatpush1.msra.mxu0 %v25
    %82 = vmatprep.subr.mxu0 0.0
    %83 = vmatpush1.msra.mxu0 %v26
    %84 = vmatprep.subr.mxu0 0.0
    %85 = vmatpush1.msra.mxu0 %v27
    %86 = vmatprep.subr.mxu0 0.0
    %87 = vmatpush1.msra.mxu0 %v28
    %88 = vmatprep.subr.mxu0 0.0
    %89 = vmatpush1.msra.mxu0 %v29
    %90 = vmatprep.subr.mxu0 0.0
    %91 = vmatpush1.msra.mxu0 %v30
    %92 = vmatprep.subr.mxu0 0.0
    %93 = vmatpush1.msra.mxu0 %v31
    %94 = vmatprep.subr.mxu0 0.0
    %95 = vmatpush1.msra.mxu0 %v32
    %96 = vmatprep.subr.mxu0 0.0
    %97 = vmatpush1.msra.mxu0 %v33
    %98 = vmatprep.subr.mxu0 0.0
    %99 = vmatpush1.msra.mxu0 %v34
    %100 = vmatprep.subr.mxu0 0.0
    %101 = vmatpush1.msra.mxu0 %v35
    %102 = vmatprep.subr.mxu0 0.0
    %103 = vmatpush1.msra.mxu0 %v36
    %104 = vmatprep.subr.mxu0 0.0
    %105 = vmatpush1.msra.mxu0 %v37
    %106 = vmatprep.subr.mxu0 0.0
    %107 = vmatpush1.msra.mxu0 %v38
    %108 = vmatprep.subr.mxu0 0.0
    %109 = vmatpush1.msra.mxu0 %v39
    %110 = vmatprep.subr.mxu0 0.0
    %111 = vmatpush1.msra.mxu0 %v40
    %112 = vmatprep.subr.mxu0 0.0
    %113 = vmatpush1.msra.mxu0 %v41
    %114 = vmatprep.subr.mxu0 0.0
    %115 = vmatpush1.msra.mxu0 %v42
    %116 = vmatprep.subr.mxu0 0.0
    %117 = vmatpush1.msra.mxu0 %v43
    %118 = vmatprep.subr.mxu0 0.0
    %119 = vmatpush1.msra.mxu0 %v44
    %120 = vmatprep.mubr.f32.mxu0 %v53
    %121 = vmatmul.mubr.f32.gmra.mrb[0].mxu0 %v52
    %v122 = vpop.f32.mrb[0].mxu0
    %v123 = vadd.f32 0.0, %v122
    %v124 = vpop.f32.mrb[0].mxu0
    %125 = vdwg.mxu0
    %vm126 = vcmask 58368
    %v127 = vsel %vm126, %v123, -inf
    %128 = vmax.xlane.f32.xlu0 %v127
    %v129 = vpop.xlane.xlu0 %128
    %v130 = vsub.f32 %v123, %v129
    %v131 = vmul.f32 %v130, 1.442695
    %v132 = vpow.pop %v131
    %v133 = vsel %vm126, %v132, 0.0
    %134 = vadd.xlane.f32.xlu0 %v133
    %v135 = vpop.xlane.xlu0 %134
    %v136 = vrcp.pop %v135
    %v137 = vmul.f32 %v132, %v136
    %138 = vst.msk [vmem:[#allocation2] sm:$0x3] %vm126, %v137
    // Predicated region
    $region10: #{tpu_custom_call.1} parent=1 // pred_check
      _
    $region11: #{tpu_custom_call.1} parent=1 // pred_check_branch
      %140 = sbr.rel (0) target = $region13
    $region12: #{tpu_custom_call.1} parent=1 // pred_region
      %s142 = ssub.s32 32, 32
      %143 = vsyncadd [#allocation3], %s142
      %s145 = sshll.u32 [#allocation2], 4
      %s146 = int_to_ptr.vmem [resolvable:$true] %s145
      %148 = dma.vmem_to_hbm [thread:$0]  %s146, 32, %s2, [#allocation3]
    $region13: #{tpu_custom_call.1} parent=1 // pred_fallthru
      _
    // Predicated region
    $region14: #{tpu_custom_call.1} parent=1 // pred_check
      _
    $region15: #{tpu_custom_call.1} parent=1 // pred_check_branch
      %150 = sbr.rel (0) target = $region17
    $region16: #{tpu_custom_call.1} parent=1 // pred_region
      %151 = dma.done [#allocation3], 32
    $region17: #{tpu_custom_call.1} parent=1 // pred_fallthru
      _
    %152 = vsyncpa [#allocation3], 1

</llo_original>
